<compile_context>
chip_gen: v6e
topology: v6e:2x2x1
jax: 0.10.0
libtpu: 0.0.40
codegen_flags: <defaults>
</compile_context>

<pallas_src>
import functools

import jax
import jax.numpy as jnp
from jax.experimental import pallas as pl
from jax.experimental.pallas import tpu as pltpu


def _round_up(x, m):
    return (x + m - 1) // m * m


def _select_tiles(n, d, itemsize, tq, tk):
    """Clamp/adjust tile sizes; return (tq, tk, n_pad)."""
    n8 = _round_up(n, 8)
    tq = min(tq, n8)
    tk = min(tk, n8)
    # v7x megacore: prefer >= 2 row tiles when the problem is big enough so
    # both TensorCores get work along the "parallel" axis (harmless elsewhere).
    if n8 >= 16:
        tq = min(tq, _round_up((n8 + 1) // 2, 8))
    tq = _round_up(max(tq, 8), 8)
    tk = _round_up(max(tk, 8), 8)

    # VMEM budget: double-buffered k/q input blocks + f32 logits tile + small
    # scratches/output. Shrink the larger tile until it fits comfortably.
    def vmem_est(a, b):
        return (2 * (a + b) * d * itemsize   # double-buffered (tq,d)/(tk,d) inputs
                + a * b * 4                  # f32 logits tile (internal)
                + 5 * a * 4)                 # out block (x2) + 3 (tq,1) scratches

    budget = 20 * 1024 * 1024
    while vmem_est(tq, tk) > budget and max(tq, tk) > 128:
        if tq >= tk:
            tq = max(128, tq // 2)
        else:
            tk = max(128, tk // 2)

    # Keep the tiles nested so n_pad is an exact multiple of both.
    if tq % tk != 0 and tk % tq != 0:
        tk = tq
    n_pad = _round_up(n, max(tq, tk))
    return tq, tk, n_pad


def _nce_lse_kernel(k_ref, q_ref, out_ref, m_sc, l_sc, d_sc, *,
                    n_valid, n_pad, tq, tk):
    """Grid step: row tile i ("parallel") x key-column tile j ("arbitrary")."""
    i = pl.program_id(0)
    j = pl.program_id(1)
    nj = pl.num_programs(1)

    @pl.when(j == 0)
    def _():
        m_sc[...] = jnp.full(m_sc.shape, -jnp.inf, dtype=m_sc.dtype)
        l_sc[...] = jnp.zeros(l_sc.shape, dtype=l_sc.dtype)
        d_sc[...] = jnp.zeros(d_sc.shape, dtype=d_sc.dtype)

    # s[r, c] = <k_r, q_c> / temperature  (1/T already folded into q).
    # Native-dtype operands on the MXU, f32 accumulation.
    s = jax.lax.dot_general(
        k_ref[...], q_ref[...],
        dimension_numbers=(((1,), (1,)), ((), ())),
        preferred_element_type=jnp.float32)                    # (tq, tk) f32

    # Diagonal term out[i, i]: accumulate from the logits tile, but only on
    # the column tiles that overlap this row block's diagonal band.
    @pl.when((j * tk < (i + 1) * tq) & ((j + 1) * tk > i * tq))
    def _():
        row_g = i * tq + jax.lax.broadcasted_iota(jnp.int32, s.shape, 0)
        col_g = j * tk + jax.lax.broadcasted_iota(jnp.int32, s.shape, 1)
        d_sc[...] += jnp.sum(jnp.where(row_g == col_g, s, 0.0),
                             axis=-1, keepdims=True)

    def lse_update(sv):
        m_prev = m_sc[...]
        m_new = jnp.maximum(m_prev, jnp.max(sv, axis=-1, keepdims=True))
        p = jnp.exp(sv - m_new)
        l_sc[...] = jnp.exp(m_prev - m_new) * l_sc[...] + jnp.sum(
            p, axis=-1, keepdims=True)
        m_sc[...] = m_new

    if n_valid == n_pad:
        # No padded columns anywhere: mask-free hot path (decided at trace time).
        lse_update(s)
    else:
        # Only column tiles with index >= first_pad_tile contain padded
        # columns; all earlier tiles take the mask-free path at runtime.
        first_pad_tile = n_valid // tk

        @pl.when(j < first_pad_tile)
        def _():
            lse_update(s)

        @pl.when(j >= first_pad_tile)
        def _():
            col_g = j * tk + jax.lax.broadcasted_iota(jnp.int32, s.shape, 1)
            lse_update(jnp.where(col_g < n_valid, s, -jnp.inf))

    @pl.when(j == nj - 1)
    def _():
        # per-row: logsumexp_j(out[i, j]) - out[i, i]
        out_ref[...] = (m_sc[...] + jnp.log(l_sc[...])) - d_sc[...]


def nce_loss(k, q, temperature, *, tq=1024, tk=512, mxu_dtype=None):
    """PointInfoNCE loss. k, q: (N, D) arrays. Returns f32 scalar."""
    assert k.ndim == 2 and k.shape == q.shape
    n, d = k.shape

    # Fold 1/temperature into q once (O(N*D), fuses with padding below). For
    # bf16 inputs this rounds the scale into bf16 before the MXU (~2^-8 rel),
    # a deliberate trade for dropping the per-row-block scale pass + scratch.
    q = q * jnp.asarray(1.0 / float(temperature), dtype=q.dtype)

    # Optional bf16 operands for bf16-native MXUs (v6e/v7x); also halves DMA.
    if mxu_dtype is not None and jnp.dtype(mxu_dtype) != jnp.dtype(k.dtype):
        k = k.astype(mxu_dtype)
        q = q.astype(mxu_dtype)
    itemsize = jnp.dtype(k.dtype).itemsize

    tq, tk, n_pad = _select_tiles(n, d, itemsize, int(tq), int(tk))

    if n_pad != n:
        k = jnp.pad(k, ((0, n_pad - n), (0, 0)))
        q = jnp.pad(q, ((0, n_pad - n), (0, 0)))

    grid = (n_pad // tq, n_pad // tk)
    kernel = functools.partial(
        _nce_lse_kernel, n_valid=n, n_pad=n_pad, tq=tq, tk=tk)

    per_row = pl.pallas_call(
        kernel,
        out_shape=jax.ShapeDtypeStruct((n_pad, 1), jnp.float32),
        grid_spec=pltpu.PrefetchScalarGridSpec(
            num_scalar_prefetch=0,
            grid=grid,
            in_specs=[
                # k row block (re-fetched only when i changes).
                pl.BlockSpec((tq, d), lambda i, j: (i, 0)),
                # q rows acting as key columns of the logits.
                pl.BlockSpec((tk, d), lambda i, j: (j, 0)),
            ],
            out_specs=pl.BlockSpec((tq, 1), lambda i, j: (i, 0)),
            scratch_shapes=[
                pltpu.VMEM((tq, 1), jnp.float32),  # running max  m
                pltpu.VMEM((tq, 1), jnp.float32),  # running sum  l
                pltpu.VMEM((tq, 1), jnp.float32),  # diagonal logits
            ],
        ),
        compiler_params=pltpu.CompilerParams(
            dimension_semantics=("parallel", "arbitrary"),
            vmem_limit_bytes=40 * 1024 * 1024),
        cost_estimate=pl.CostEstimate(
            flops=2 * n_pad * n_pad * d,
            transcendentals=n_pad * n_pad,
            # q column tiles are re-streamed once per row block; k once.
            bytes_accessed=(grid[0] * n_pad * d + n_pad * d) * itemsize
                           + n_pad * 4),
    )(k, q)

    # Final O(N) reduction (drop padded rows); trivial vs. the kernel work.
    return jnp.sum(per_row[:n, 0]) / n


def _reference_nce_loss(k, q, temperature):
    logits = jnp.dot(k.astype(jnp.float32), q.astype(jnp.float32).T) / temperature
    lse = jax.scipy.special.logsumexp(logits, axis=-1)
    diag = jnp.diagonal(logits)
    return jnp.mean(lse - diag)


if __name__ == "__main__":
    key = jax.random.PRNGKey(0)
    temperature = 0.07

    # Small batch of point embeddings, consistent with the module's (N, D) input.
    N, D = 40, 32
    kk, kq = jax.random.split(key)
    k = jax.random.normal(kk, (N, D), dtype=jnp.float32)
    q = jax.random.normal(kq, (N, D), dtype=jnp.float32)

    ref = jax.block_until_ready(_reference_nce_loss(k, q, temperature))

    # Default tiles: 2 row tiles x 1 padded column tile (exercises masking
    # branch, diagonal-overlap gating, megacore-friendly row split).
    loss = jax.block_until_ready(nce_loss(k, q, temperature))
    assert jnp.allclose(loss, ref, rtol=1e-4, atol=1e-3), (loss, ref)

    # Tiny tiles: multi-column-tile online logsumexp with fully-valid tiles on
    # the mask-free path and a single masked last tile (N=40 -> 48, 3x3 grid).
    loss_tiled = jax.block_until_ready(nce_loss(k, q, temperature, tq=16, tk=16))
    assert jnp.allclose(loss_tiled, ref, rtol=1e-4, atol=1e-3), (loss_tiled, ref)

    # Slightly larger, non-128-multiple D (no D padding needed by design).
    N2, D2 = 300, 96
    k2 = jax.random.normal(jax.random.PRNGKey(1), (N2, D2), dtype=jnp.float32)
    q2 = jax.random.normal(jax.random.PRNGKey(2), (N2, D2), dtype=jnp.float32)
    ref2 = jax.block_until_ready(_reference_nce_loss(k2, q2, temperature))
    loss2 = jax.block_until_ready(nce_loss(k2, q2, temperature))
    assert jnp.allclose(loss2, ref2, rtol=1e-4, atol=1e-2), (loss2, ref2)

    print("KERNEL_OK")
</pallas_src>

<mosaic_0001>
module attributes {stable_mosaic.version = 11 : i64} {
  func.func @_nce_lse_kernel(%arg0: i32, %arg1: i32, %arg2: memref<24x32xf32, #tpu.memory_space<vmem>>, %arg3: memref<24x32xf32, #tpu.memory_space<vmem>>, %arg4: memref<24x1xf32, #tpu.memory_space<vmem>>, %arg5: memref<24x1xf32, #tpu.memory_space<vmem>>, %arg6: memref<24x1xf32, #tpu.memory_space<vmem>>, %arg7: memref<24x1xf32, #tpu.memory_space<vmem>>) attributes {dimension_semantics = [#tpu.dimension_semantics<parallel>, #tpu.dimension_semantics<arbitrary>], iteration_bounds = array<i64: 2, 2>, scalar_prefetch = 0 : i64, scratch_operands = 3 : i64, tpu.core_type = #tpu.core_type<tc>, window_params = [{transform_indices = @transform_0, window_bounds = array<i64: 24, 32>}, {transform_indices = @transform_1, window_bounds = array<i64: 24, 32>}, {transform_indices = @transform_2, window_bounds = array<i64: 24, 1>}]} {
    %c0_i32 = arith.constant 0 : i32
    %0 = arith.cmpi eq, %arg1, %c0_i32 : i32
    %1 = arith.extui %0 : i1 to i32
    %c0_i32_0 = arith.constant 0 : i32
    %2 = arith.cmpi ne, %1, %c0_i32_0 : i32
    scf.if %2 {
      %cst_15 = arith.constant 0xFF800000 : f32
      %26 = vector.broadcast %cst_15 : f32 to vector<24x1xf32>
      %c0_16 = arith.constant 0 : index
      %c0_17 = arith.constant 0 : index
      %27 = vector.load %arg5[%c0_16, %c0_17] : memref<24x1xf32, #tpu.memory_space<vmem>>, vector<24x1xf32>
      tpu.vector_store %arg5[%c0_16, %c0_17], %26 {strides = array<i32>} : memref<24x1xf32, #tpu.memory_space<vmem>>, vector<24x1xf32>,
      %cst_18 = arith.constant 0.000000e+00 : f32
      %28 = vector.broadcast %cst_18 : f32 to vector<24x1xf32>
      %c0_19 = arith.constant 0 : index
      %c0_20 = arith.constant 0 : index
      %29 = vector.load %arg6[%c0_19, %c0_20] : memref<24x1xf32, #tpu.memory_space<vmem>>, vector<24x1xf32>
      tpu.vector_store %arg6[%c0_19, %c0_20], %28 {strides = array<i32>} : memref<24x1xf32, #tpu.memory_space<vmem>>, vector<24x1xf32>,
      %cst_21 = arith.constant 0.000000e+00 : f32
      %30 = vector.broadcast %cst_21 : f32 to vector<24x1xf32>
      %c0_22 = arith.constant 0 : index
      %c0_23 = arith.constant 0 : index
      %31 = vector.load %arg7[%c0_22, %c0_23] : memref<24x1xf32, #tpu.memory_space<vmem>>, vector<24x1xf32>
      tpu.vector_store %arg7[%c0_22, %c0_23], %30 {strides = array<i32>} : memref<24x1xf32, #tpu.memory_space<vmem>>, vector<24x1xf32>,
    } else {
    }
    %c0 = arith.constant 0 : index
    %c0_1 = arith.constant 0 : index
    %3 = vector.load %arg2[%c0, %c0_1] : memref<24x32xf32, #tpu.memory_space<vmem>>, vector<24x32xf32>
    %c0_2 = arith.constant 0 : index
    %c0_3 = arith.constant 0 : index
    %4 = vector.load %arg3[%c0_2, %c0_3] : memref<24x32xf32, #tpu.memory_space<vmem>>, vector<24x32xf32>
    %cst = arith.constant dense<0.000000e+00> : vector<24x24xf32>
    %5 = tpu.matmul %3, %4, %cst {dimension_numbers = #tpu.dot_dimension_numbers<[1], [1], [0], [0], [0, 0, 1, 0], [], []>} : vector<24x32xf32>, vector<24x32xf32>, vector<24x24xf32> -> vector<24x24xf32>
    %c24_i32 = arith.constant 24 : i32
    %6 = arith.muli %arg1, %c24_i32 : i32
    %c1_i32 = arith.constant 1 : i32
    %7 = arith.addi %arg0, %c1_i32 : i32
    %c24_i32_4 = arith.constant 24 : i32
    %8 = arith.muli %7, %c24_i32_4 : i32
    %9 = arith.cmpi slt, %6, %8 : i32
    %c1_i32_5 = arith.constant 1 : i32
    %10 = arith.addi %arg1, %c1_i32_5 : i32
    %c24_i32_6 = arith.constant 24 : i32
    %11 = arith.muli %10, %c24_i32_6 : i32
    %c24_i32_7 = arith.constant 24 : i32
    %12 = arith.muli %arg0, %c24_i32_7 : i32
    %13 = arith.cmpi sgt, %11, %12 : i32
    %14 = arith.andi %9, %13 : i1
    %15 = arith.extui %14 : i1 to i32
    %c0_i32_8 = arith.constant 0 : i32
    %16 = arith.cmpi ne, %15, %c0_i32_8 : i32
    scf.if %16 {
      %c24_i32_15 = arith.constant 24 : i32
      %26 = arith.muli %arg0, %c24_i32_15 : i32
      %27 = tpu.iota {dimensions = array<i32: 0>} : vector<24x24xi32>
      %28 = vector.broadcast %26 : i32 to vector<24x24xi32>
      %29 = arith.addi %28, %27 : vector<24x24xi32>
      %c24_i32_16 = arith.constant 24 : i32
      %30 = arith.muli %arg1, %c24_i32_16 : i32
      %31 = tpu.iota {dimensions = array<i32: 1>} : vector<24x24xi32>
      %32 = vector.broadcast %30 : i32 to vector<24x24xi32>
      %33 = arith.addi %32, %31 : vector<24x24xi32>
      %c0_17 = arith.constant 0 : index
      %c0_18 = arith.constant 0 : index
      %34 = vector.load %arg7[%c0_17, %c0_18] : memref<24x1xf32, #tpu.memory_space<vmem>>, vector<24x1xf32>
      %35 = arith.cmpi eq, %29, %33 : vector<24x24xi32>
      %cst_19 = arith.constant 0.000000e+00 : f32
      %36 = vector.broadcast %cst_19 : f32 to vector<24x24xf32>
      %37 = arith.select %35, %5, %36 : vector<24x24xi1>, vector<24x24xf32>
      %cst_20 = arith.constant dense<0.000000e+00> : vector<24xf32>
      %38 = vector.multi_reduction <add>, %37, %cst_20 [1] : vector<24x24xf32> to vector<24xf32>
      %39 = vector.shape_cast %38 : vector<24xf32> to vector<24x1xf32>
      %40 = arith.addf %34, %39 : vector<24x1xf32>
      %c0_21 = arith.constant 0 : index
      %c0_22 = arith.constant 0 : index
      %41 = vector.load %arg7[%c0_21, %c0_22] : memref<24x1xf32, #tpu.memory_space<vmem>>, vector<24x1xf32>
      tpu.vector_store %arg7[%c0_21, %c0_22], %40 {strides = array<i32>} : memref<24x1xf32, #tpu.memory_space<vmem>>, vector<24x1xf32>,
    } else {
    }
    %c1_i32_9 = arith.constant 1 : i32
    %17 = arith.cmpi slt, %arg1, %c1_i32_9 : i32
    %18 = arith.extui %17 : i1 to i32
    %c0_i32_10 = arith.constant 0 : i32
    %19 = arith.cmpi ne, %18, %c0_i32_10 : i32
    scf.if %19 {
      %c0_15 = arith.constant 0 : index
      %c0_16 = arith.constant 0 : index
      %26 = vector.load %arg5[%c0_15, %c0_16] : memref<24x1xf32, #tpu.memory_space<vmem>>, vector<24x1xf32>
      %cst_17 = arith.constant dense<0xFF800000> : vector<24xf32>
      %27 = vector.multi_reduction <maximumf>, %5, %cst_17 [1] : vector<24x24xf32> to vector<24xf32>
      %28 = vector.shape_cast %27 : vector<24xf32> to vector<24x1xf32>
      %29 = arith.maximumf %26, %28 : vector<24x1xf32>
      %30 = vector.broadcast %29 : vector<24x1xf32> to vector<24x24xf32>
      %31 = arith.subf %5, %30 : vector<24x24xf32>
      %32 = math.exp %31 : vector<24x24xf32>
      %33 = arith.subf %26, %29 : vector<24x1xf32>
      %34 = math.exp %33 : vector<24x1xf32>
      %c0_18 = arith.constant 0 : index
      %c0_19 = arith.constant 0 : index
      %35 = vector.load %arg6[%c0_18, %c0_19] : memref<24x1xf32, #tpu.memory_space<vmem>>, vector<24x1xf32>
      %36 = arith.mulf %34, %35 : vector<24x1xf32>
      %cst_20 = arith.constant dense<0.000000e+00> : vector<24xf32>
      %37 = vector.multi_reduction <add>, %32, %cst_20 [1] : vector<24x24xf32> to vector<24xf32>
      %38 = vector.shape_cast %37 : vector<24xf32> to vector<24x1xf32>
      %39 = arith.addf %36, %38 : vector<24x1xf32>
      %c0_21 = arith.constant 0 : index
      %c0_22 = arith.constant 0 : index
      %40 = vector.load %arg6[%c0_21, %c0_22] : memref<24x1xf32, #tpu.memory_space<vmem>>, vector<24x1xf32>
      tpu.vector_store %arg6[%c0_21, %c0_22], %39 {strides = array<i32>} : memref<24x1xf32, #tpu.memory_space<vmem>>, vector<24x1xf32>,
      %c0_23 = arith.constant 0 : index
      %c0_24 = arith.constant 0 : index
      %41 = vector.load %arg5[%c0_23, %c0_24] : memref<24x1xf32, #tpu.memory_space<vmem>>, vector<24x1xf32>
      tpu.vector_store %arg5[%c0_23, %c0_24], %29 {strides = array<i32>} : memref<24x1xf32, #tpu.memory_space<vmem>>, vector<24x1xf32>,
    } else {
    }
    %c1_i32_11 = arith.constant 1 : i32
    %20 = arith.cmpi sge, %arg1, %c1_i32_11 : i32
    %21 = arith.extui %20 : i1 to i32
    %c0_i32_12 = arith.constant 0 : i32
    %22 = arith.cmpi ne, %21, %c0_i32_12 : i32
    scf.if %22 {
      %c24_i32_15 = arith.constant 24 : i32
      %26 = arith.muli %arg1, %c24_i32_15 : i32
      %27 = tpu.iota {dimensions = array<i32: 1>} : vector<24x24xi32>
      %28 = vector.broadcast %26 : i32 to vector<24x24xi32>
      %29 = arith.addi %28, %27 : vector<24x24xi32>
      %c40_i32 = arith.constant 40 : i32
      %30 = vector.broadcast %c40_i32 : i32 to vector<24x24xi32>
      %31 = arith.cmpi slt, %29, %30 : vector<24x24xi32>
      %cst_16 = arith.constant 0xFF800000 : f32
      %32 = vector.broadcast %cst_16 : f32 to vector<24x24xf32>
      %33 = arith.select %31, %5, %32 : vector<24x24xi1>, vector<24x24xf32>
      %c0_17 = arith.constant 0 : index
      %c0_18 = arith.constant 0 : index
      %34 = vector.load %arg5[%c0_17, %c0_18] : memref<24x1xf32, #tpu.memory_space<vmem>>, vector<24x1xf32>
      %cst_19 = arith.constant dense<0xFF800000> : vector<24xf32>
      %35 = vector.multi_reduction <maximumf>, %33, %cst_19 [1] : vector<24x24xf32> to vector<24xf32>
      %36 = vector.shape_cast %35 : vector<24xf32> to vector<24x1xf32>
      %37 = arith.maximumf %34, %36 : vector<24x1xf32>
      %38 = vector.broadcast %37 : vector<24x1xf32> to vector<24x24xf32>
      %39 = arith.subf %33, %38 : vector<24x24xf32>
      %40 = math.exp %39 : vector<24x24xf32>
      %41 = arith.subf %34, %37 : vector<24x1xf32>
      %42 = math.exp %41 : vector<24x1xf32>
      %c0_20 = arith.constant 0 : index
      %c0_21 = arith.constant 0 : index
      %43 = vector.load %arg6[%c0_20, %c0_21] : memref<24x1xf32, #tpu.memory_space<vmem>>, vector<24x1xf32>
      %44 = arith.mulf %42, %43 : vector<24x1xf32>
      %cst_22 = arith.constant dense<0.000000e+00> : vector<24xf32>
      %45 = vector.multi_reduction <add>, %40, %cst_22 [1] : vector<24x24xf32> to vector<24xf32>
      %46 = vector.shape_cast %45 : vector<24xf32> to vector<24x1xf32>
      %47 = arith.addf %44, %46 : vector<24x1xf32>
      %c0_23 = arith.constant 0 : index
      %c0_24 = arith.constant 0 : index
      %48 = vector.load %arg6[%c0_23, %c0_24] : memref<24x1xf32, #tpu.memory_space<vmem>>, vector<24x1xf32>
      tpu.vector_store %arg6[%c0_23, %c0_24], %47 {strides = array<i32>} : memref<24x1xf32, #tpu.memory_space<vmem>>, vector<24x1xf32>,
      %c0_25 = arith.constant 0 : index
      %c0_26 = arith.constant 0 : index
      %49 = vector.load %arg5[%c0_25, %c0_26] : memref<24x1xf32, #tpu.memory_space<vmem>>, vector<24x1xf32>
      tpu.vector_store %arg5[%c0_25, %c0_26], %37 {strides = array<i32>} : memref<24x1xf32, #tpu.memory_space<vmem>>, vector<24x1xf32>,
    } else {
    }
    %c1_i32_13 = arith.constant 1 : i32
    %23 = arith.cmpi eq, %arg1, %c1_i32_13 : i32
    %24 = arith.extui %23 : i1 to i32
    %c0_i32_14 = arith.constant 0 : i32
    %25 = arith.cmpi ne, %24, %c0_i32_14 : i32
    scf.if %25 {
      %c0_15 = arith.constant 0 : index
      %c0_16 = arith.constant 0 : index
      %26 = vector.load %arg5[%c0_15, %c0_16] : memref<24x1xf32, #tpu.memory_space<vmem>>, vector<24x1xf32>
      %c0_17 = arith.constant 0 : index
      %c0_18 = arith.constant 0 : index
      %27 = vector.load %arg6[%c0_17, %c0_18] : memref<24x1xf32, #tpu.memory_space<vmem>>, vector<24x1xf32>
      %28 = math.log %27 : vector<24x1xf32>
      %29 = arith.addf %26, %28 : vector<24x1xf32>
      %c0_19 = arith.constant 0 : index
      %c0_20 = arith.constant 0 : index
      %30 = vector.load %arg7[%c0_19, %c0_20] : memref<24x1xf32, #tpu.memory_space<vmem>>, vector<24x1xf32>
      %31 = arith.subf %29, %30 : vector<24x1xf32>
      %c0_21 = arith.constant 0 : index
      %c0_22 = arith.constant 0 : index
      %32 = vector.load %arg4[%c0_21, %c0_22] : memref<24x1xf32, #tpu.memory_space<vmem>>, vector<24x1xf32>
      tpu.vector_store %arg4[%c0_21, %c0_22], %31 {strides = array<i32>} : memref<24x1xf32, #tpu.memory_space<vmem>>, vector<24x1xf32>,
    } else {
    }
    return
  }
  func.func @transform_0(%arg0: i32, %arg1: i32) -> (i32, i32) {
    %c0_i32 = arith.constant 0 : i32
    %c0_i32_0 = arith.constant 0 : i32
    return %arg0, %c0_i32 : i32, i32
  }
  func.func @transform_1(%arg0: i32, %arg1: i32) -> (i32, i32) {
    %c0_i32 = arith.constant 0 : i32
    %c0_i32_0 = arith.constant 0 : i32
    return %arg1, %c0_i32 : i32, i32
  }
  func.func @transform_2(%arg0: i32, %arg1: i32) -> (i32, i32) {
    %c0_i32 = arith.constant 0 : i32
    %c0_i32_0 = arith.constant 0 : i32
    return %arg0, %c0_i32 : i32, i32
  }
}

</mosaic_0001>

<llo_original>
// kernel: tpu_custom_call.1
$region0: #{tpu_custom_call.1}
  #allocation0 [shape = 'u32[]', space=smem, size = 0x4, offset = 0x4, fixed_abs, tag = 'smem constant byte address 0x4 - core index']
  #allocation1 [shape = 'u32[144,128]{1,0:T(1,128)}', space=vmem, size = 0x12000, scoped, tag = 'internal scratch']
  #allocation2 [shape = 'f32[24,1]{1,0:T(8,128)}', space=vmem, size = 0x3000, scoped, tag = 'scratch operand']
  #allocation3 [shape = 'f32[24,1]{1,0:T(8,128)}', space=vmem, size = 0x3000, scoped, tag = 'scratch operand']
  #allocation4 [shape = 'f32[24,1]{1,0:T(8,128)}', space=vmem, size = 0x3000, scoped, tag = 'scratch operand']
  %s0 = inlined_call_operand.vmem [shape: f32[48,32], index: 0, kind: input, shape index: {}]
  %s1 = inlined_call_operand.vmem [shape: f32[48,32], index: 1, kind: input, shape index: {}]
  %s2 = inlined_call_operand.vmem [shape: f32[48,1], index: 2, kind: output, shape index: {}]
  %s3 = sld [smem:[#allocation0]]
  $region61: #{tpu_custom_call.1} parent=0
    _
  %s5 = ssub.s32 1, %s3
  %s6 = scalar_select 0, %s5, %s3
  loop: start=0, step=1, limit=6
  $region2: #{tpu_custom_call.1} parent=0 // loop_pre_header
    _
  $region3: #{tpu_custom_call.1} parent=0 // loop_header
    %s8 = sphi 0, %s12
    %p9 = scmp.ge.s32.totalorder %s8, 6
    %s15 = sphi 0, %s27
    %s16 = sphi 0, %s23
    %s17 = sphi 0, %s15
    %s18 = sphi 0, %s16
    %s19 = sphi 0, %s17
    %s20 = sphi 0, %s18
    %s30 = sphi 0, %s32
    %s33 = sphi 0, %s30
    %s34 = sphi 0, %s33
    %s50 = sphi 0, %s34
    %s56 = sphi 0, %s58
    %s59 = sphi 0, %s56
    %s60 = sphi 0, %s59
    %s76 = sphi 0, %s60
    %s82 = sphi 0, %s84
    %s85 = sphi 0, %s82
    %s86 = sphi 0, %s85
    %s102 = sphi 0, %s86
  $region4: #{tpu_custom_call.1} parent=0 // loop_header_branch
    %11 = sbr.rel (%p9) target = $region8
  $region5: #{tpu_custom_call.1} parent=0 // loop_body
    %s13 = ssub.s32 %s8, 1
    %s14 = ssub.s32 %s8, 2
    %s21 = sadd.s32 1, %s16
    %p22 = scmp.ge.s32.totalorder %s21, 2
    %s23 = scalar_select %p22, 0, %s21
    %s24 = sadd.s32 1, %s15
    %s25 = scalar_select %p22, %s24, %s15
    %p26 = scmp.ge.s32.totalorder %s25, 2
    %s27 = scalar_select %p26, 0, %s25
    %s28 = ssub.s32 %s15, %s27
    %p29 = scmp.eq.s32.totalorder %s28, 0
    %s31 = sadd.s32 %s30, 1
    %s32 = scalar_select %p29, %s30, %s31
    %p35 = pneg %p29
    %p36 = scmp.eq.s32.totalorder %s8, 3
    %p37 = por %p35, %p36
    %p38 = scmp.ne.s32.totalorder %s30, %s33
    %p39 = scmp.eq.s32.totalorder %s8, 0
    %p40 = por %p38, %p39
    %p41 = scmp.ne.s32.totalorder %s30, %s33
    %p42 = scmp.eq.s32.totalorder %s13, 3
    %p43 = por %p41, %p42
    %p44 = scmp.ne.s32.totalorder %s33, %s34
    %p45 = scmp.eq.s32.totalorder %s13, 0
    %p46 = por %p44, %p45
    %p47 = scmp.ne.s32.totalorder %s33, %s34
    %p48 = scmp.eq.s32.totalorder %s14, 3
    %p49 = por %p47, %p48
    %p51 = scmp.ne.s32.totalorder %s34, %s50
    %p52 = scmp.eq.s32.totalorder %s14, 0
    %p53 = por %p51, %p52
    %s54 = ssub.s32 %s16, %s23
    %p55 = scmp.eq.s32.totalorder %s54, 0
    %s57 = sadd.s32 %s56, 1
    %s58 = scalar_select %p55, %s56, %s57
    %p61 = pneg %p55
    %p62 = scmp.eq.s32.totalorder %s8, 3
    %p63 = por %p61, %p62
    %p64 = scmp.ne.s32.totalorder %s56, %s59
    %p65 = scmp.eq.s32.totalorder %s8, 0
    %p66 = por %p64, %p65
    %p67 = scmp.ne.s32.totalorder %s56, %s59
    %p68 = scmp.eq.s32.totalorder %s13, 3
    %p69 = por %p67, %p68
    %p70 = scmp.ne.s32.totalorder %s59, %s60
    %p71 = scmp.eq.s32.totalorder %s13, 0
    %p72 = por %p70, %p71
    %p73 = scmp.ne.s32.totalorder %s59, %s60
    %p74 = scmp.eq.s32.totalorder %s14, 3
    %p75 = por %p73, %p74
    %p77 = scmp.ne.s32.totalorder %s60, %s76
    %p78 = scmp.eq.s32.totalorder %s14, 0
    %p79 = por %p77, %p78
    %s80 = ssub.s32 %s15, %s27
    %p81 = scmp.eq.s32.totalorder %s80, 0
    %s83 = sadd.s32 %s82, 1
    %s84 = scalar_select %p81, %s82, %s83
    %p87 = pneg %p81
    %p88 = scmp.eq.s32.totalorder %s8, 3
    %p89 = por %p87, %p88
    %p90 = scmp.ne.s32.totalorder %s82, %s85
    %p91 = scmp.eq.s32.totalorder %s8, 0
    %p92 = por %p90, %p91
    %p93 = scmp.ne.s32.totalorder %s82, %s85
    %p94 = scmp.eq.s32.totalorder %s13, 3
    %p95 = por %p93, %p94
    %p96 = scmp.ne.s32.totalorder %s85, %s86
    %p97 = scmp.eq.s32.totalorder %s13, 0
    %p98 = por %p96, %p97
    %p99 = scmp.ne.s32.totalorder %s85, %s86
    %p100 = scmp.eq.s32.totalorder %s14, 3
    %p101 = por %p99, %p100
    %p103 = scmp.ne.s32.totalorder %s86, %s102
    %p104 = scmp.eq.s32.totalorder %s14, 0
    %p105 = por %p103, %p104
    %p106 = scmp.le.s32.totalorder 1, %s8
    %p107 = scmp.lt.s32.totalorder %s8, 5
    %p108 = pnand %p106, %p107
    %p109 = pneg %p108
    // Predicated region
    $region9: #{tpu_custom_call.1} parent=5 // pred_check
      _
    $region10: #{tpu_custom_call.1} parent=5 // pred_check_branch
      %111 = sbr.rel (%p108) target = $region12
    $region11: #{tpu_custom_call.1} parent=5 // pred_region
      %s112 = ssub.s32 %s8, 1
    $region12: #{tpu_custom_call.1} parent=5 // pred_fallthru
      _
    %p113 = scmp.lt.s32.totalorder %s8, 4
    // Predicated region
    $region13: #{tpu_custom_call.1} parent=5 // pred_check
      %p114 = pneg %p113
    $region14: #{tpu_custom_call.1} parent=5 // pred_check_branch
      %116 = sbr.rel (%p114) target = $region16
    $region15: #{tpu_custom_call.1} parent=5 // pred_region
      // Predicated region
      $region17: #{tpu_custom_call.1} parent=15 // pred_check
        %p117 = pneg %p40
      $region18: #{tpu_custom_call.1} parent=15 // pred_check_branch
        %119 = sbr.rel (%p117) target = $region20
      $region19: #{tpu_custom_call.1} parent=15 // pred_region
        %s120 = smul.u32 3, %s15
        %p121 = scmp.lt.s32.totalorder %s120, 5
        %s122 = scalar_select %p121, %s120, 5
        %s123 = smul.addr %s122, 8
        %s124 = scalar_lea.vmem %s0, %s123
        %s125 = smul.u32 3, %s15
      $region20: #{tpu_custom_call.1} parent=15 // pred_fallthru
        _
      // Predicated region
      $region21: #{tpu_custom_call.1} parent=15 // pred_check
        %p126 = pneg %p66
      $region22: #{tpu_custom_call.1} parent=15 // pred_check_branch
        %128 = sbr.rel (%p126) target = $region24
      $region23: #{tpu_custom_call.1} parent=15 // pred_region
        %s129 = smul.u32 3, %s16
        %p130 = scmp.lt.s32.totalorder %s129, 5
        %s131 = scalar_select %p130, %s129, 5
        %s132 = smul.addr %s131, 8
        %s133 = scalar_lea.vmem %s1, %s132
        %s134 = smul.u32 3, %s16
      $region24: #{tpu_custom_call.1} parent=15 // pred_fallthru
        _
    $region16: #{tpu_custom_call.1} parent=5 // pred_fallthru
      _
    %p135 = scmp.le.s32.totalorder 1, %s8
    %p136 = scmp.lt.s32.totalorder %s8, 5
    %p137 = pnand %p135, %p136
    %p138 = pneg %p137
    // Predicated region
    $region25: #{tpu_custom_call.1} parent=5 // pred_check
      _
    $region26: #{tpu_custom_call.1} parent=5 // pred_check_branch
      %140 = sbr.rel (%p137) target = $region28
    $region27: #{tpu_custom_call.1} parent=5 // pred_region
      %s141 = ssub.s32 %s8, 1
      %s142 = smul.u32 3, %s17
      %p143 = scmp.lt.s32.totalorder %s142, 5
      %s144 = scalar_select %p143, %s142, 5
      %s145 = smul.addr %s144, 8
      %s146 = scalar_lea.vmem %s0, %s145
      %p147 = pneg %p46
      %p148 = pneg %p43
      %s149 = smul.u32 3, %s18
      %p150 = scmp.lt.s32.totalorder %s149, 5
      %s151 = scalar_select %p150, %s149, 5
      %s152 = smul.addr %s151, 8
      %s153 = scalar_lea.vmem %s1, %s152
      %p154 = pneg %p72
      %p155 = pneg %p69
      %p156 = pneg %p98
      %p157 = pneg %p95
      %s158 = smul.u32 3, %s17
      %p159 = scmp.lt.s32.totalorder %s158, 5
      %s160 = scalar_select %p159, %s158, 5
      %s161 = smul.addr %s160, 8
      %s162 = scalar_lea.vmem %s2, %s161
      %s163 = smul.u32 3, %s17
      %p164 = scmp.lt.s32.totalorder %s163, 5
      %s165 = scalar_select %p164, %s163, 5
      %s166 = smul.addr %s165, 8
      %s167 = scalar_lea.vmem %s0, %s166
      %s168 = smul.u32 3, %s17
      %s169 = smul.u32 3, %s18
      %p170 = scmp.lt.s32.totalorder %s169, 5
      %s171 = scalar_select %p170, %s169, 5
      %s172 = smul.addr %s171, 8
      %s173 = scalar_lea.vmem %s1, %s172
      %s174 = smul.u32 3, %s18
      %s175 = smul.u32 3, %s17
      %p176 = scmp.lt.s32.totalorder %s175, 5
      %s177 = scalar_select %p176, %s175, 5
      %s178 = smul.addr %s177, 8
      %s179 = scalar_lea.vmem %s2, %s178
      %s180 = smul.u32 3, %s17
      %p181 = scmp.eq.s32.totalorder %s18, 0
      // Predicated region
      $region29: #{tpu_custom_call.1} parent=27 // pred_check
        %p182 = pneg %p181
      $region30: #{tpu_custom_call.1} parent=27 // pred_check_branch
        %184 = sbr.rel (%p182) target = $region32
      $region31: #{tpu_custom_call.1} parent=27 // pred_region
        %vm185 = vcmask 7168
        %186 = vst.msk [vmem:[#allocation2] sm:$0xff] %vm185, -inf
        %187 = vst.msk [vmem:[#allocation2 + $0x8] sm:$0xff] %vm185, -inf
        %188 = vst.msk [vmem:[#allocation2 + $0x10] sm:$0xff] %vm185, -inf
        %189 = vst.msk [vmem:[#allocation3] sm:$0xff] %vm185, 0.0
        %190 = vst.msk [vmem:[#allocation3 + $0x8] sm:$0xff] %vm185, 0.0
        %191 = vst.msk [vmem:[#allocation3 + $0x10] sm:$0xff] %vm185, 0.0
        %192 = vst.msk [vmem:[#allocation4] sm:$0xff] %vm185, 0.0
        %193 = vst.msk [vmem:[#allocation4 + $0x8] sm:$0xff] %vm185, 0.0
        %194 = vst.msk [vmem:[#allocation4 + $0x10] sm:$0xff] %vm185, 0.0
      $region32: #{tpu_custom_call.1} parent=27 // pred_fallthru
        _
      %v195 = vld [vmem:[%s167] sm:$0xff]
      %v196 = vld [vmem:[%s167 + $0x8] sm:$0xff]
      %v197 = vld [vmem:[%s167 + $0x10] sm:$0xff]
      %v198 = vld [vmem:[%s173] sm:$0xff]
      %v199 = vld [vmem:[%s173 + $0x8] sm:$0xff]
      %v200 = vld [vmem:[%s173 + $0x10] sm:$0xff]
      %vm201 = vcmask 261120
      %v203 = vsel %vm201, %v195, 0
      %v206 = vsel %vm201, %v196, 0
      %v209 = vsel %vm201, %v197, 0
      %v212 = vsel %vm201, %v198, 0
      %v215 = vsel %vm201, %v199, 0
      %v218 = vsel %vm201, %v200, 0
      %220 = vmatprep.subr.mxu0 0.0
      %221 = vmatpush1.xpose.msra.mxu0 0.0
      %222 = vmatprep.subr.mxu0 0.0
      %223 = vmatpush1.xpose.msra.mxu0 0.0
      %224 = vmatprep.subr.mxu0 0.0
      %225 = vmatpush1.xpose.msra.mxu0 0.0
      %226 = vmatprep.subr.mxu0 0.0
      %227 = vmatpush1.xpose.msra.mxu0 0.0
      %228 = vmatprep.subr.mxu0 0.0
      %229 = vmatpush1.xpose.msra.mxu0 0.0
      %230 = vmatprep.subr.mxu0 0.0
      %231 = vmatpush1.xpose.msra.mxu0 0.0
      %232 = vmatprep.subr.mxu0 0.0
      %233 = vmatpush1.xpose.msra.mxu0 0.0
      %234 = vmatprep.subr.mxu0 0.0
      %235 = vmatpush1.xpose.msra.mxu0 0.0
      %236 = vmatprep.subr.mxu0 0.0
      %237 = vmatpush1.xpose.msra.mxu0 0.0
      %238 = vmatprep.subr.mxu0 0.0
      %239 = vmatpush1.xpose.msra.mxu0 0.0
      %240 = vmatprep.subr.mxu0 0.0
      %241 = vmatpush1.xpose.msra.mxu0 0.0
      %242 = vmatprep.subr.mxu0 0.0
      %243 = vmatpush1.xpose.msra.mxu0 0.0
      %244 = vmatprep.subr.mxu0 0.0
      %245 = vmatpush1.xpose.msra.mxu0 0.0
      %246 = vmatprep.subr.mxu0 0.0
      %247 = vmatpush1.xpose.msra.mxu0 %v218
      %248 = vmatprep.subr.mxu0 0.0
      %249 = vmatpush1.xpose.msra.mxu0 %v215
      %250 = vmatprep.subr.mxu0 0.0
      %251 = vmatpush1.xpose.msra.mxu0 %v212
      %252 = vmatprep.subr.mxu0 0.0
      %253 = vmatpush2.xpose.msra.mxu0 0.0
      %254 = vmatprep.subr.mxu0 0.0
      %255 = vmatpush2.xpose.msra.mxu0 0.0
      %256 = vmatprep.subr.mxu0 0.0
      %257 = vmatpush2.xpose.msra.mxu0 0.0
      %258 = vmatprep.subr.mxu0 0.0
      %259 = vmatpush2.xpose.msra.mxu0 0.0
      %260 = vmatprep.subr.mxu0 0.0
      %261 = vmatpush2.xpose.msra.mxu0 0.0
      %262 = vmatprep.subr.mxu0 0.0
      %263 = vmatpush2.xpose.msra.mxu0 0.0
      %264 = vmatprep.subr.mxu0 0.0
      %265 = vmatpush2.xpose.msra.mxu0 0.0
      %266 = vmatprep.subr.mxu0 0.0
      %267 = vmatpush2.xpose.msra.mxu0 0.0
      %268 = vmatprep.subr.mxu0 0.0
      %269 = vmatpush2.xpose.msra.mxu0 0.0
      %270 = vmatprep.subr.mxu0 0.0
      %271 = vmatpush2.xpose.msra.mxu0 0.0
      %272 = vmatprep.subr.mxu0 0.0
      %273 = vmatpush2.xpose.msra.mxu0 0.0
      %274 = vmatprep.subr.mxu0 0.0
      %275 = vmatpush2.xpose.msra.mxu0 0.0
      %276 = vmatprep.subr.mxu0 0.0
      %277 = vmatpush2.xpose.msra.mxu0 0.0
      %278 = vmatprep.subr.mxu0 0.0
      %279 = vmatpush2.xpose.msra.mxu0 0.0
      %280 = vmatprep.subr.mxu0 0.0
      %281 = vmatpush2.xpose.msra.mxu0 0.0
      %282 = vmatprep.subr.mxu0 0.0
      %283 = vmatpush2.xpose.msra.mxu0 0.0
      %284 = vmatprep.mubr.f32.mxu0 0.0
      %285 = vmatmul.mubr.f32.gmra.mxu0 %v203
      %v286 = vpop.f32.mrf.mxu0
      %v287 = vadd.f32 0.0, %v286
      %v288 = vpop.f32.mrf.mxu0
      %289 = vmatprep.mubr.f32.mxu0 0.0
      %290 = vmatmul.mubr.f32.gmra.mxu0 %v206
      %v291 = vpop.f32.mrf.mxu0
      %v292 = vadd.f32 0.0, %v291
      %v293 = vpop.f32.mrf.mxu0
      %294 = vmatprep.mubr.f32.mxu0 0.0
      %295 = vmatmul.mubr.f32.gmra.mxu0 %v209
      %v296 = vpop.f32.mrf.mxu0
      %v297 = vadd.f32 0.0, %v296
      %v298 = vpop.f32.mrf.mxu0
      %299 = vdwg.mxu0
      %s300 = smul.u32 %s18, 24
      %s301 = sadd.s32 %s17, 1
      %s302 = smul.u32 %s301, 24
      %p303 = scmp.lt.s32.totalorder %s300, %s302
      %s304 = sadd.s32 %s18, 1
      %s305 = smul.u32 %s304, 24
      %s306 = smul.u32 %s17, 24
      %p307 = scmp.gt.s32.totalorder %s305, %s306
      %p308 = pnand %p303, %p307
      %p309 = pneg %p308
      // Predicated region
      $region33: #{tpu_custom_call.1} parent=27 // pred_check
        _
      $region34: #{tpu_custom_call.1} parent=27 // pred_check_branch
        %311 = sbr.rel (%p308) target = $region36
      $region35: #{tpu_custom_call.1} parent=27 // pred_region
        %v312 = vlaneseq
        %v313 = vshrl.u32 %v312, 7
        %v314 = vadd.s32 %v313, 8
        %v315 = vadd.s32 %v313, 16
        %v316 = vstv %s306
        %v317 = vadd.s32 %v316, %v313
        %v318 = vadd.s32 %v316, %v314
        %v319 = vadd.s32 %v316, %v315
        %v320 = vlaneseq
        %v321 = vand.u32 %v320, 127
        %v322 = vstv %s300
        %v323 = vadd.s32 %v322, %v321
        %v324 = vld [vmem:[#allocation4] sm:$0xff]
        %v325 = vld [vmem:[#allocation4 + $0x8] sm:$0xff]
        %v326 = vld [vmem:[#allocation4 + $0x10] sm:$0xff]
        %vm327 = vcmp.eq.s32.totalorder %v317, %v323
        %vm328 = vcmp.eq.s32.totalorder %v318, %v323
        %vm329 = vcmp.eq.s32.totalorder %v319, %v323
        %v330 = vsel %vm327, %v287, 0.0
        %v331 = vsel %vm328, %v292, 0.0
        %v332 = vsel %vm329, %v297, 0.0
        %vm333 = vcmask 195584
        %v334 = vsel %vm333, %v330, 0.0
        %335 = vadd.xlane.f32.xlu0 %v334
        %v336 = vpop.xlane.xlu0 %335
        %v337 = vsel %vm333, %v331, 0.0
        %338 = vadd.xlane.f32.xlu0 %v337
        %v339 = vpop.xlane.xlu0 %338
        %v340 = vsel %vm333, %v332, 0.0
        %341 = vadd.xlane.f32.xlu0 %v340
        %v342 = vpop.xlane.xlu0 %341
        %v343 = vadd.f32 %v324, %v336
        %v344 = vadd.f32 %v325, %v339
        %v345 = vadd.f32 %v326, %v342
        %vm346 = vcmask 7168
        %347 = vst.msk [vmem:[#allocation4] sm:$0xff] %vm346, %v343
        %348 = vst.msk [vmem:[#allocation4 + $0x8] sm:$0xff] %vm346, %v344
        %349 = vst.msk [vmem:[#allocation4 + $0x10] sm:$0xff] %vm346, %v345
      $region36: #{tpu_custom_call.1} parent=27 // pred_fallthru
        _
      %p350 = scmp.lt.s32.totalorder %s18, 1
      // Predicated region
      $region37: #{tpu_custom_call.1} parent=27 // pred_check
        %p351 = pneg %p350
      $region38: #{tpu_custom_call.1} parent=27 // pred_check_branch
        %353 = sbr.rel (%p351) target = $region40
      $region39: #{tpu_custom_call.1} parent=27 // pred_region
        %v354 = vld [vmem:[#allocation2] sm:$0xff]
        %v355 = vld [vmem:[#allocation2 + $0x8] sm:$0xff]
        %v356 = vld [vmem:[#allocation2 + $0x10] sm:$0xff]
        %vm357 = vcmask 195584
        %v358 = vsel %vm357, %v287, -inf
        %359 = vmax.xlane.f32.xlu0 %v358
        %v360 = vpop.xlane.xlu0 %359
        %v361 = vsel %vm357, %v292, -inf
        %362 = vmax.xlane.f32.xlu0 %v361
        %v363 = vpop.xlane.xlu0 %362
        %v364 = vsel %vm357, %v297, -inf
        %365 = vmax.xlane.f32.xlu0 %v364
        %v366 = vpop.xlane.xlu0 %365
        %v367 = vmax.f32 %v354, %v360
        %v368 = vmax.f32 %v355, %v363
        %v369 = vmax.f32 %v356, %v366
        %371 = vset.pattern.permute.xlu0 0
        %372 = vperm.xlu0 %371, %v367
        %v373 = vpop.permute.xlu0 %372
        %376 = vset.pattern.permute.xlu0 0
        %377 = vperm.xlu0 %376, %v368
        %v378 = vpop.permute.xlu0 %377
        %381 = vset.pattern.permute.xlu0 0
        %382 = vperm.xlu0 %381, %v369
        %v383 = vpop.permute.xlu0 %382
        %v385 = vsub.f32 %v287, %v373
        %v386 = vsub.f32 %v292, %v378
        %v387 = vsub.f32 %v297, %v383
        %v388 = vmul.f32 %v385, 1.442695
        %v389 = vpow.pop %v388
        %v390 = vmul.f32 %v386, 1.442695
        %v391 = vpow.pop %v390
        %v392 = vmul.f32 %v387, 1.442695
        %v393 = vpow.pop %v392
        %v394 = vsub.f32 %v354, %v367
        %v395 = vsub.f32 %v355, %v368
        %v396 = vsub.f32 %v356, %v369
        %v397 = vmul.f32 %v394, 1.442695
        %v398 = vpow.pop %v397
        %v399 = vmul.f32 %v395, 1.442695
        %v400 = vpow.pop %v399
        %v401 = vmul.f32 %v396, 1.442695
        %v402 = vpow.pop %v401
        %v403 = vld [vmem:[#allocation3] sm:$0xff]
        %v404 = vld [vmem:[#allocation3 + $0x8] sm:$0xff]
        %v405 = vld [vmem:[#allocation3 + $0x10] sm:$0xff]
        %v406 = vmul.f32 %v398, %v403
        %v407 = vmul.f32 %v400, %v404
        %v408 = vmul.f32 %v402, %v405
        %v409 = vsel %vm357, %v389, 0.0
        %410 = vadd.xlane.f32.xlu0 %v409
        %v411 = vpop.xlane.xlu0 %410
        %v412 = vsel %vm357, %v391, 0.0
        %413 = vadd.xlane.f32.xlu0 %v412
        %v414 = vpop.xlane.xlu0 %413
        %v415 = vsel %vm357, %v393, 0.0
        %416 = vadd.xlane.f32.xlu0 %v415
        %v417 = vpop.xlane.xlu0 %416
        %v418 = vadd.f32 %v406, %v411
        %v419 = vadd.f32 %v407, %v414
        %v420 = vadd.f32 %v408, %v417
        %vm421 = vcmask 7168
        %422 = vst.msk [vmem:[#allocation3] sm:$0xff] %vm421, %v418
        %423 = vst.msk [vmem:[#allocation3 + $0x8] sm:$0xff] %vm421, %v419
        %424 = vst.msk [vmem:[#allocation3 + $0x10] sm:$0xff] %vm421, %v420
        %425 = vst.msk [vmem:[#allocation2] sm:$0xff] %vm421, %v367
        %426 = vst.msk [vmem:[#allocation2 + $0x8] sm:$0xff] %vm421, %v368
        %427 = vst.msk [vmem:[#allocation2 + $0x10] sm:$0xff] %vm421, %v369
      $region40: #{tpu_custom_call.1} parent=27 // pred_fallthru
        _
      %p428 = scmp.ge.s32.totalorder %s18, 1
      // Predicated region
      $region41: #{tpu_custom_call.1} parent=27 // pred_check
        %p429 = pneg %p428
      $region42: #{tpu_custom_call.1} parent=27 // pred_check_branch
        %431 = sbr.rel (%p429) target = $region44
      $region43: #{tpu_custom_call.1} parent=27 // pred_region
        %v432 = vlaneseq
        %v433 = vand.u32 %v432, 127
        %v434 = vstv %s300
        %v435 = vadd.s32 %v434, %v433
        %vm436 = vcmp.lt.s32.totalorder %v435, 40
        %v437 = vsel %vm436, %v287, -inf
        %v438 = vsel %vm436, %v292, -inf
        %v439 = vsel %vm436, %v297, -inf
        %v440 = vld [vmem:[#allocation2] sm:$0xff]
        %v441 = vld [vmem:[#allocation2 + $0x8] sm:$0xff]
        %v442 = vld [vmem:[#allocation2 + $0x10] sm:$0xff]
        %vm443 = vcmask 195584
        %v444 = vsel %vm443, %v437, -inf
        %445 = vmax.xlane.f32.xlu0 %v444
        %v446 = vpop.xlane.xlu0 %445
        %v447 = vsel %vm443, %v438, -inf
        %448 = vmax.xlane.f32.xlu0 %v447
        %v449 = vpop.xlane.xlu0 %448
        %v450 = vsel %vm443, %v439, -inf
        %451 = vmax.xlane.f32.xlu0 %v450
        %v452 = vpop.xlane.xlu0 %451
        %v453 = vmax.f32 %v440, %v446
        %v454 = vmax.f32 %v441, %v449
        %v455 = vmax.f32 %v442, %v452
        %457 = vset.pattern.permute.xlu0 0
        %458 = vperm.xlu0 %457, %v453
        %v459 = vpop.permute.xlu0 %458
        %462 = vset.pattern.permute.xlu0 0
        %463 = vperm.xlu0 %462, %v454
        %v464 = vpop.permute.xlu0 %463
        %467 = vset.pattern.permute.xlu0 0
        %468 = vperm.xlu0 %467, %v455
        %v469 = vpop.permute.xlu0 %468
        %v471 = vsub.f32 %v437, %v459
        %v472 = vsub.f32 %v438, %v464
        %v473 = vsub.f32 %v439, %v469
        %v474 = vmul.f32 %v471, 1.442695
        %v475 = vpow.pop %v474
        %v476 = vmul.f32 %v472, 1.442695
        %v477 = vpow.pop %v476
        %v478 = vmul.f32 %v473, 1.442695
        %v479 = vpow.pop %v478
        %v480 = vsub.f32 %v440, %v453
        %v481 = vsub.f32 %v441, %v454
        %v482 = vsub.f32 %v442, %v455
        %v483 = vmul.f32 %v480, 1.442695
        %v484 = vpow.pop %v483
        %v485 = vmul.f32 %v481, 1.442695
        %v486 = vpow.pop %v485
        %v487 = vmul.f32 %v482, 1.442695
        %v488 = vpow.pop %v487
        %v489 = vld [vmem:[#allocation3] sm:$0xff]
        %v490 = vld [vmem:[#allocation3 + $0x8] sm:$0xff]
        %v491 = vld [vmem:[#allocation3 + $0x10] sm:$0xff]
        %v492 = vmul.f32 %v484, %v489
        %v493 = vmul.f32 %v486, %v490
        %v494 = vmul.f32 %v488, %v491
        %v495 = vsel %vm443, %v475, 0.0
        %496 = vadd.xlane.f32.xlu0 %v495
        %v497 = vpop.xlane.xlu0 %496
        %v498 = vsel %vm443, %v477, 0.0
        %499 = vadd.xlane.f32.xlu0 %v498
        %v500 = vpop.xlane.xlu0 %499
        %v501 = vsel %vm443, %v479, 0.0
        %502 = vadd.xlane.f32.xlu0 %v501
        %v503 = vpop.xlane.xlu0 %502
        %v504 = vadd.f32 %v492, %v497
        %v505 = vadd.f32 %v493, %v500
        %v506 = vadd.f32 %v494, %v503
        %vm507 = vcmask 7168
        %508 = vst.msk [vmem:[#allocation3] sm:$0xff] %vm507, %v504
        %509 = vst.msk [vmem:[#allocation3 + $0x8] sm:$0xff] %vm507, %v505
        %510 = vst.msk [vmem:[#allocation3 + $0x10] sm:$0xff] %vm507, %v506
        %511 = vst.msk [vmem:[#allocation2] sm:$0xff] %vm507, %v453
        %512 = vst.msk [vmem:[#allocation2 + $0x8] sm:$0xff] %vm507, %v454
        %513 = vst.msk [vmem:[#allocation2 + $0x10] sm:$0xff] %vm507, %v455
      $region44: #{tpu_custom_call.1} parent=27 // pred_fallthru
        _
      %p514 = scmp.eq.s32.totalorder %s18, 1
      // Predicated region
      $region45: #{tpu_custom_call.1} parent=27 // pred_check
        %p515 = pneg %p514
      $region46: #{tpu_custom_call.1} parent=27 // pred_check_branch
        %517 = sbr.rel (%p515) target = $region48
      $region47: #{tpu_custom_call.1} parent=27 // pred_region
        %v518 = vld [vmem:[#allocation2] sm:$0xff]
        %v519 = vld [vmem:[#allocation2 + $0x8] sm:$0xff]
        %v520 = vld [vmem:[#allocation2 + $0x10] sm:$0xff]
        %v521 = vld [vmem:[#allocation3] sm:$0xff]
        %v522 = vld [vmem:[#allocation3 + $0x8] sm:$0xff]
        %v523 = vld [vmem:[#allocation3 + $0x10] sm:$0xff]
        %v524 = vlog2.pop %v521
        %v525 = vmul.f32 %v524, 0.6931472
        %v526 = vlog2.pop %v522
        %v527 = vmul.f32 %v526, 0.6931472
        %v528 = vlog2.pop %v523
        %v529 = vmul.f32 %v528, 0.6931472
        %v530 = vadd.f32 %v518, %v525
        %v531 = vadd.f32 %v519, %v527
        %v532 = vadd.f32 %v520, %v529
        %v533 = vld [vmem:[#allocation4] sm:$0xff]
        %v534 = vld [vmem:[#allocation4 + $0x8] sm:$0xff]
        %v535 = vld [vmem:[#allocation4 + $0x10] sm:$0xff]
        %v536 = vsub.f32 %v530, %v533
        %v537 = vsub.f32 %v531, %v534
        %v538 = vsub.f32 %v532, %v535
        %vm539 = vcmask 7168
        %540 = vst.msk [vmem:[%s179] sm:$0xff] %vm539, %v536
        %541 = vst.msk [vmem:[%s179 + $0x8] sm:$0xff] %vm539, %v537
        %542 = vst.msk [vmem:[%s179 + $0x10] sm:$0xff] %vm539, %v538
      $region48: #{tpu_custom_call.1} parent=27 // pred_fallthru
        _
      %s543 = smul.u32 3, %s17
      %p544 = scmp.lt.s32.totalorder %s543, 5
      %s545 = scalar_select %p544, %s543, 5
      %s546 = smul.addr %s545, 8
      %s547 = scalar_lea.vmem %s2, %s546
      // Predicated region
      $region49: #{tpu_custom_call.1} parent=27 // pred_check
        %p548 = pneg %p95
      $region50: #{tpu_custom_call.1} parent=27 // pred_check_branch
        %550 = sbr.rel (%p548) target = $region52
      $region51: #{tpu_custom_call.1} parent=27 // pred_region
        %s551 = smul.u32 3, %s17
      $region52: #{tpu_custom_call.1} parent=27 // pred_fallthru
        _
    $region28: #{tpu_custom_call.1} parent=5 // pred_fallthru
      _
    %p552 = scmp.le.s32.totalorder 2, %s8
    // Predicated region
    $region53: #{tpu_custom_call.1} parent=5 // pred_check
      %p553 = pneg %p552
    $region54: #{tpu_custom_call.1} parent=5 // pred_check_branch
      %555 = sbr.rel (%p553) target = $region56
    $region55: #{tpu_custom_call.1} parent=5 // pred_region
      %s556 = ssub.s32 %s8, 2
      // Predicated region
      $region57: #{tpu_custom_call.1} parent=55 // pred_check
        %p557 = pneg %p101
      $region58: #{tpu_custom_call.1} parent=55 // pred_check_branch
        %559 = sbr.rel (%p557) target = $region60
      $region59: #{tpu_custom_call.1} parent=55 // pred_region
        %s560 = smul.u32 3, %s19
        %p561 = scmp.lt.s32.totalorder %s560, 5
        %s562 = scalar_select %p561, %s560, 5
        %s563 = smul.addr %s562, 8
        %s564 = scalar_lea.vmem %s2, %s563
      $region60: #{tpu_custom_call.1} parent=55 // pred_fallthru
        _
    $region56: #{tpu_custom_call.1} parent=5 // pred_fallthru
      _
  $region6: #{tpu_custom_call.1} parent=0 // loop_footer
    %s12 = sadd.s32 1, %s8
  $region7: #{tpu_custom_call.1} parent=0 // loop_footer_branch
    %7 = sbr.rel target = $region3
  $region8: #{tpu_custom_call.1} parent=0 // loop_exit
    _

</llo_original>
